<compile_context>
chip_gen: v5e
topology: v5e:2x2
jax: 0.10.0
libtpu: 0.0.40
codegen_flags: <defaults>
</compile_context>

<pallas_src>
import functools

import jax
import jax.numpy as jnp
import numpy as np
from jax import lax
from jax.experimental import pallas as pl
from jax.experimental.pallas import tpu as pltpu


# ---------------- fused Pallas kernel ----------------

def _fused_gmhsa_kernel(seqlen_ref,                 # SMEM (B,) i32, scalar-prefetched
                        xq_ref, xk_ref, xv_ref,     # (1, T, D) per-batch blocks
                        w_ref,                      # (4, D, D): Wq, Wk, Wv, Wo (raw)
                        bqkv_ref,                   # (3, D, 1): bq, bk, bv (columns)
                        bo_ref,                     # (1, D):    bo (row)
                        scale_ref,                  # (T, T): punish / sqrt(T)
                        o_ref,                      # (1, T, D) output block
                        ctx_ref,                    # VMEM scratch (T, D) f32
                        *, num_heads):
    b = pl.program_id(0)
    _, T, D = xq_ref.shape
    E = num_heads
    DE = D // E
    nt = (((1,), (1,)), ((), ()))   # contract last dims: a @ b.T  (MXU-native "NT")

    xq = xq_ref[0]                  # (T, D)
    xk = xk_ref[0]
    xv = xv_ref[0]

    # Projections computed directly in transposed (D, T) layout:
    #   qpT[d, t] = (xq @ Wq^T + bq)[t, d]
    qpT = lax.dot_general(w_ref[0], xq, nt,
                          preferred_element_type=jnp.float32) + bqkv_ref[0]
    kpT = lax.dot_general(w_ref[1], xk, nt,
                          preferred_element_type=jnp.float32) + bqkv_ref[1]
    vpT = lax.dot_general(w_ref[2], xv, nt,
                          preferred_element_type=jnp.float32) + bqkv_ref[2]

    L = seqlen_ref[b]                                   # valid frames of utterance b
    row = lax.broadcasted_iota(jnp.int32, (T, T), 0)
    pad_mask = row >= L                                 # padded query rows
    scale = scale_ref[...]                              # gaussian punish * 1/sqrt(T)

    # PyTorch head split permute(0,2,1).reshape(B*E, T, DE): head h of batch b is
    # rows [h*DE, (h+1)*DE) of the (D, T) projection, reread row-major as (T, DE).
    for h in range(E):                                  # E is small -> unrolled
        rs = slice(h * DE, (h + 1) * DE)
        q_h = qpT[rs, :].reshape(T, DE)
        k_h = kpT[rs, :].reshape(T, DE)
        v_h = vpT[rs, :].reshape(T, DE)

        s = lax.dot_general(q_h, k_h, nt,               # Q_h @ K_h^T
                            preferred_element_type=jnp.float32)
        s = s * scale                                   # (QK/sqrt(T)) * punish
        s = jnp.where(pad_mask, jnp.float32(-1e7), s)   # masked_fill(-1e7)

        a = jnp.abs(s)                                  # softmax over |scores|
        a = a - jnp.max(a, axis=-1, keepdims=True)
        e = jnp.exp(a)
        inv = pl.reciprocal(jnp.sum(e, axis=-1, keepdims=True), approx=False)
        p = e * inv

        # matmul(S,V).permute(0,2,1).reshape(B,D,T).permute(0,2,1) == head concat.
        ctx_ref[:, rs] = jnp.dot(p, v_h, preferred_element_type=jnp.float32)

    out = lax.dot_general(ctx_ref[...], w_ref[3], nt,   # linear_o_: ctx @ Wo^T + bo
                          preferred_element_type=jnp.float32) + bo_ref[...] + xq
    o_ref[0] = out.astype(o_ref.dtype)
    # TODO(synk): the debug `print('mask x', ...)` inside Mask_Softmax_Input is a
    # side-effect only and is intentionally not reproduced.


# ---------------- module forward ----------------

def gaussian_multihead_sa2_forward(params, inputQ, inputK, inputV, seq_len,
                                   B, D, E, is_punish):
    T = max(seq_len)
    inv_sqrt_T = np.float32(1.0 / np.sqrt(np.float32(T)))

    # Hoisted once: Gaussian punish matrix (depends only on theta and T) with the
    # 1/sqrt(T) score scale folded in.
    if is_punish:
        idx = jnp.arange(T, dtype=jnp.float32)
        theta = params['theta'].astype(jnp.float32)
        punish = jnp.exp(-((idx[None, :] - idx[:, None]) ** 2) / (theta ** 2))
        scale_mat = (punish * inv_sqrt_T).astype(jnp.float32)
    else:
        scale_mat = jnp.full((T, T), inv_sqrt_T, dtype=jnp.float32)

    w_all = jnp.stack([params['Wq'], params['Wk'], params['Wv'], params['Wo']])
    b_qkv = jnp.stack([params['bq'], params['bk'], params['bv']]).reshape(3, D, 1)
    b_o = params['bo'].reshape(1, D)
    seqlen = jnp.asarray(seq_len, dtype=jnp.int32)

    kernel = functools.partial(_fused_gmhsa_kernel, num_heads=E)
    grid_spec = pltpu.PrefetchScalarGridSpec(
        num_scalar_prefetch=1,                           # per-batch seq lens -> SMEM
        grid=(B,),
        in_specs=[
            pl.BlockSpec((1, T, D), lambda b, sl: (b, 0, 0)),   # inputQ
            pl.BlockSpec((1, T, D), lambda b, sl: (b, 0, 0)),   # inputK
            pl.BlockSpec((1, T, D), lambda b, sl: (b, 0, 0)),   # inputV
            pl.BlockSpec((4, D, D), lambda b, sl: (0, 0, 0)),   # Wq/Wk/Wv/Wo resident
            pl.BlockSpec((3, D, 1), lambda b, sl: (0, 0, 0)),   # bq/bk/bv (columns)
            pl.BlockSpec((1, D), lambda b, sl: (0, 0)),         # bo (row)
            pl.BlockSpec((T, T), lambda b, sl: (0, 0)),         # punish / sqrt(T)
        ],
        out_specs=pl.BlockSpec((1, T, D), lambda b, sl: (b, 0, 0)),
        scratch_shapes=[pltpu.VMEM((T, D), jnp.float32)],
    )
    A = pl.pallas_call(
        kernel,
        out_shape=jax.ShapeDtypeStruct((B, T, D), jnp.float32),
        grid_spec=grid_spec,
        compiler_params=pltpu.CompilerParams(
            dimension_semantics=("parallel",)),          # batches independent (v7x 2 TCs)
    )(seqlen, inputQ, inputK, inputV, w_all, b_qkv, b_o, scale_mat)
    return A, seq_len


# ---------------- pure-JAX reference (for verification) ----------------

def reference_forward(params, inputQ, inputK, inputV, seq_len, B, D, E, is_punish):
    T = max(seq_len)
    DE = D // E
    hp = jax.lax.Precision.HIGHEST

    def lin(x, w, b):
        return jnp.einsum('btd,od->bto', x, w, precision=hp) + b

    Qp = lin(inputQ, params['Wq'], params['bq'])
    Kp = lin(inputK, params['Wk'], params['bk'])
    Vp = lin(inputV, params['Wv'], params['bv'])
    Q = jnp.transpose(Qp, (0, 2, 1)).reshape(B * E, T, DE)
    K = jnp.transpose(Kp, (0, 2, 1)).reshape(B * E, T, DE).transpose(0, 2, 1)
    V = jnp.transpose(Vp, (0, 2, 1)).reshape(B * E, T, DE)

    x3 = jnp.einsum('bij,bjk->bik', Q, K, precision=hp) / jnp.sqrt(jnp.float32(T))
    if is_punish:
        idx = jnp.arange(T, dtype=jnp.float32)
        punish = jnp.exp(-((idx[None, :] - idx[:, None]) ** 2) / (params['theta'] ** 2))
        x3 = x3 * punish[None]

    seqlen_per_head = jnp.repeat(jnp.asarray(seq_len, dtype=jnp.int32), E)
    row = jnp.arange(T)[None, :, None]
    x3 = jnp.where(row >= seqlen_per_head[:, None, None], -1e7, x3)
    S = jax.nn.softmax(jnp.abs(x3), axis=2)

    ctx = jnp.einsum('bij,bjk->bik', S, V, precision=hp)
    ctx = jnp.transpose(ctx, (0, 2, 1)).reshape(B, D, T).transpose(0, 2, 1)
    A = lin(ctx, params['Wo'], params['bo']) + inputQ
    return A


# ---------------- main ----------------

if __name__ == "__main__":
    # hparams: B=2, D=32, head_nums=4, is_punish=True, init_gaussion_theta=5.0
    B, T, D, E = 2, 8, 32, 4
    is_punish = True
    init_theta = 5.0
    seq_len = [8, 6]      # second utterance is padded -> rows 6,7 masked

    key = jax.random.PRNGKey(0)
    ks = jax.random.split(key, 12)

    def nrm(k, shape, scale=0.1):
        return scale * jax.random.normal(k, shape, dtype=jnp.float32)

    params = {
        'Wq': nrm(ks[0], (D, D)), 'bq': nrm(ks[1], (D,)),
        'Wk': nrm(ks[2], (D, D)), 'bk': nrm(ks[3], (D,)),
        'Wv': nrm(ks[4], (D, D)), 'bv': nrm(ks[5], (D,)),
        'Wo': nrm(ks[6], (D, D)), 'bo': nrm(ks[7], (D,)),
        'theta': jnp.array([init_theta], dtype=jnp.float32),
    }
    inputQ = nrm(ks[8], (B, T, D), 1.0)
    inputK = nrm(ks[9], (B, T, D), 1.0)
    inputV = nrm(ks[10], (B, T, D), 1.0)

    A, out_seq_len = gaussian_multihead_sa2_forward(
        params, inputQ, inputK, inputV, seq_len, B, D, E, is_punish)
    A = jax.block_until_ready(A)

    A_ref = reference_forward(params, inputQ, inputK, inputV, seq_len, B, D, E, is_punish)
    np.testing.assert_allclose(np.asarray(A), np.asarray(A_ref), rtol=2e-3, atol=2e-3)

    print("KERNEL_OK")
</pallas_src>

<mosaic_0001>
module attributes {stable_mosaic.version = 11 : i64} {
  func.func @_fused_gmhsa_kernel(%arg0: i32, %arg1: memref<2xi32, #tpu.memory_space<smem>>, %arg2: memref<1x8x32xf32, #tpu.memory_space<vmem>>, %arg3: memref<1x8x32xf32, #tpu.memory_space<vmem>>, %arg4: memref<1x8x32xf32, #tpu.memory_space<vmem>>, %arg5: memref<4x32x32xf32, #tpu.memory_space<vmem>>, %arg6: memref<3x32x1xf32, #tpu.memory_space<vmem>>, %arg7: memref<1x32xf32, #tpu.memory_space<vmem>>, %arg8: memref<8x8xf32, #tpu.memory_space<vmem>>, %arg9: memref<1x8x32xf32, #tpu.memory_space<vmem>>, %arg10: memref<8x32xf32, #tpu.memory_space<vmem>>) attributes {dimension_semantics = [#tpu.dimension_semantics<parallel>], iteration_bounds = array<i64: 2>, scalar_prefetch = 1 : i64, scratch_operands = 1 : i64, tpu.core_type = #tpu.core_type<tc>, window_params = [{transform_indices = @transform_0, window_bounds = array<i64: 1, 8, 32>}, {transform_indices = @transform_1, window_bounds = array<i64: 1, 8, 32>}, {transform_indices = @transform_2, window_bounds = array<i64: 1, 8, 32>}, {pipeline_mode = #tpu.pipeline_mode<synchronous>, transform_indices = @transform_3, window_bounds = array<i64: 4, 32, 32>}, {pipeline_mode = #tpu.pipeline_mode<synchronous>, transform_indices = @transform_4, window_bounds = array<i64: 3, 32, 1>}, {pipeline_mode = #tpu.pipeline_mode<synchronous>, transform_indices = @transform_5, window_bounds = array<i64: 1, 32>}, {pipeline_mode = #tpu.pipeline_mode<synchronous>, transform_indices = @transform_6, window_bounds = array<i64: 8, 8>}, {transform_indices = @transform_7, window_bounds = array<i64: 1, 8, 32>}]} {
    %c0 = arith.constant 0 : index
    %c0_0 = arith.constant 0 : index
    %c0_1 = arith.constant 0 : index
    %0 = vector.load %arg2[%c0, %c0_0, %c0_1] : memref<1x8x32xf32, #tpu.memory_space<vmem>>, vector<1x8x32xf32>
    %1 = vector.shape_cast %0 : vector<1x8x32xf32> to vector<8x32xf32>
    %c0_2 = arith.constant 0 : index
    %c0_3 = arith.constant 0 : index
    %c0_4 = arith.constant 0 : index
    %2 = vector.load %arg3[%c0_2, %c0_3, %c0_4] : memref<1x8x32xf32, #tpu.memory_space<vmem>>, vector<1x8x32xf32>
    %3 = vector.shape_cast %2 : vector<1x8x32xf32> to vector<8x32xf32>
    %c0_5 = arith.constant 0 : index
    %c0_6 = arith.constant 0 : index
    %c0_7 = arith.constant 0 : index
    %4 = vector.load %arg4[%c0_5, %c0_6, %c0_7] : memref<1x8x32xf32, #tpu.memory_space<vmem>>, vector<1x8x32xf32>
    %5 = vector.shape_cast %4 : vector<1x8x32xf32> to vector<8x32xf32>
    %c0_8 = arith.constant 0 : index
    %c0_9 = arith.constant 0 : index
    %c0_10 = arith.constant 0 : index
    %6 = vector.load %arg5[%c0_8, %c0_9, %c0_10] : memref<4x32x32xf32, #tpu.memory_space<vmem>>, vector<1x32x32xf32>
    %7 = vector.shape_cast %6 : vector<1x32x32xf32> to vector<32x32xf32>
    %cst = arith.constant dense<0.000000e+00> : vector<32x8xf32>
    %8 = tpu.matmul %7, %1, %cst {dimension_numbers = #tpu.dot_dimension_numbers<[1], [1], [0], [0], [0, 0, 1, 0], [], []>} : vector<32x32xf32>, vector<8x32xf32>, vector<32x8xf32> -> vector<32x8xf32>
    %c0_11 = arith.constant 0 : index
    %c0_12 = arith.constant 0 : index
    %c0_13 = arith.constant 0 : index
    %9 = vector.load %arg6[%c0_11, %c0_12, %c0_13] : memref<3x32x1xf32, #tpu.memory_space<vmem>>, vector<1x32x1xf32>
    %10 = vector.shape_cast %9 : vector<1x32x1xf32> to vector<32x1xf32>
    %11 = vector.broadcast %10 : vector<32x1xf32> to vector<32x8xf32>
    %12 = arith.addf %8, %11 : vector<32x8xf32>
    %c1 = arith.constant 1 : index
    %c0_14 = arith.constant 0 : index
    %c0_15 = arith.constant 0 : index
    %13 = vector.load %arg5[%c1, %c0_14, %c0_15] : memref<4x32x32xf32, #tpu.memory_space<vmem>>, vector<1x32x32xf32>
    %14 = vector.shape_cast %13 : vector<1x32x32xf32> to vector<32x32xf32>
    %cst_16 = arith.constant dense<0.000000e+00> : vector<32x8xf32>
    %15 = tpu.matmul %14, %3, %cst_16 {dimension_numbers = #tpu.dot_dimension_numbers<[1], [1], [0], [0], [0, 0, 1, 0], [], []>} : vector<32x32xf32>, vector<8x32xf32>, vector<32x8xf32> -> vector<32x8xf32>
    %c1_17 = arith.constant 1 : index
    %c0_18 = arith.constant 0 : index
    %c0_19 = arith.constant 0 : index
    %16 = vector.load %arg6[%c1_17, %c0_18, %c0_19] : memref<3x32x1xf32, #tpu.memory_space<vmem>>, vector<1x32x1xf32>
    %17 = vector.shape_cast %16 : vector<1x32x1xf32> to vector<32x1xf32>
    %18 = vector.broadcast %17 : vector<32x1xf32> to vector<32x8xf32>
    %19 = arith.addf %15, %18 : vector<32x8xf32>
    %c2 = arith.constant 2 : index
    %c0_20 = arith.constant 0 : index
    %c0_21 = arith.constant 0 : index
    %20 = vector.load %arg5[%c2, %c0_20, %c0_21] : memref<4x32x32xf32, #tpu.memory_space<vmem>>, vector<1x32x32xf32>
    %21 = vector.shape_cast %20 : vector<1x32x32xf32> to vector<32x32xf32>
    %cst_22 = arith.constant dense<0.000000e+00> : vector<32x8xf32>
    %22 = tpu.matmul %21, %5, %cst_22 {dimension_numbers = #tpu.dot_dimension_numbers<[1], [1], [0], [0], [0, 0, 1, 0], [], []>} : vector<32x32xf32>, vector<8x32xf32>, vector<32x8xf32> -> vector<32x8xf32>
    %c2_23 = arith.constant 2 : index
    %c0_24 = arith.constant 0 : index
    %c0_25 = arith.constant 0 : index
    %23 = vector.load %arg6[%c2_23, %c0_24, %c0_25] : memref<3x32x1xf32, #tpu.memory_space<vmem>>, vector<1x32x1xf32>
    %24 = vector.shape_cast %23 : vector<1x32x1xf32> to vector<32x1xf32>
    %25 = vector.broadcast %24 : vector<32x1xf32> to vector<32x8xf32>
    %26 = arith.addf %22, %25 : vector<32x8xf32>
    %27 = arith.index_cast %arg0 : i32 to index
    %28 = memref.load %arg1[%27] : memref<2xi32, #tpu.memory_space<smem>>
    %29 = tpu.iota {dimensions = array<i32: 0>} : vector<8x8xi32>
    %30 = vector.broadcast %28 : i32 to vector<8x8xi32>
    %31 = arith.cmpi sge, %29, %30 : vector<8x8xi32>
    %c0_26 = arith.constant 0 : index
    %c0_27 = arith.constant 0 : index
    %32 = vector.load %arg8[%c0_26, %c0_27] : memref<8x8xf32, #tpu.memory_space<vmem>>, vector<8x8xf32>
    %33 = vector.extract_strided_slice %12 {offsets = [0, 0], sizes = [8, 8], strides = [1, 1]} : vector<32x8xf32> to vector<8x8xf32>
    %34 = vector.extract_strided_slice %19 {offsets = [0, 0], sizes = [8, 8], strides = [1, 1]} : vector<32x8xf32> to vector<8x8xf32>
    %35 = vector.extract_strided_slice %26 {offsets = [0, 0], sizes = [8, 8], strides = [1, 1]} : vector<32x8xf32> to vector<8x8xf32>
    %cst_28 = arith.constant dense<0.000000e+00> : vector<8x8xf32>
    %36 = tpu.matmul %33, %34, %cst_28 {dimension_numbers = #tpu.dot_dimension_numbers<[1], [1], [0], [0], [0, 0, 1, 0], [], []>} : vector<8x8xf32>, vector<8x8xf32>, vector<8x8xf32> -> vector<8x8xf32>
    %37 = arith.mulf %36, %32 : vector<8x8xf32>
    %cst_29 = arith.constant -1.000000e+07 : f32
    %38 = vector.broadcast %cst_29 : f32 to vector<8x8xf32>
    %39 = arith.select %31, %38, %37 : vector<8x8xi1>, vector<8x8xf32>
    %40 = math.absf %39 : vector<8x8xf32>
    %cst_30 = arith.constant dense<0xFF800000> : vector<8xf32>
    %41 = vector.multi_reduction <maximumf>, %40, %cst_30 [1] : vector<8x8xf32> to vector<8xf32>
    %42 = vector.shape_cast %41 : vector<8xf32> to vector<8x1xf32>
    %43 = vector.broadcast %42 : vector<8x1xf32> to vector<8x8xf32>
    %44 = arith.subf %40, %43 : vector<8x8xf32>
    %45 = math.exp %44 : vector<8x8xf32>
    %cst_31 = arith.constant dense<0.000000e+00> : vector<8xf32>
    %46 = vector.multi_reduction <add>, %45, %cst_31 [1] : vector<8x8xf32> to vector<8xf32>
    %47 = vector.shape_cast %46 : vector<8xf32> to vector<8x1xf32>
    %48 = tpu.reciprocal %47 : vector<8x1xf32> -> vector<8x1xf32>
    %49 = vector.broadcast %48 : vector<8x1xf32> to vector<8x8xf32>
    %50 = arith.mulf %45, %49 : vector<8x8xf32>
    %cst_32 = arith.constant dense<0.000000e+00> : vector<8x8xf32>
    %51 = tpu.matmul %50, %35, %cst_32 {dimension_numbers = #tpu.dot_dimension_numbers<[1], [0], [0], [1], [0, 0, 1, 1], [], []>} : vector<8x8xf32>, vector<8x8xf32>, vector<8x8xf32> -> vector<8x8xf32>
    %c0_33 = arith.constant 0 : index
    %c0_34 = arith.constant 0 : index
    %52 = vector.load %arg10[%c0_33, %c0_34] : memref<8x32xf32, #tpu.memory_space<vmem>>, vector<8x8xf32>
    tpu.vector_store %arg10[%c0_33, %c0_34], %51 {strides = array<i32>} : memref<8x32xf32, #tpu.memory_space<vmem>>, vector<8x8xf32>,
    %53 = vector.extract_strided_slice %12 {offsets = [8, 0], sizes = [8, 8], strides = [1, 1]} : vector<32x8xf32> to vector<8x8xf32>
    %54 = vector.extract_strided_slice %19 {offsets = [8, 0], sizes = [8, 8], strides = [1, 1]} : vector<32x8xf32> to vector<8x8xf32>
    %55 = vector.extract_strided_slice %26 {offsets = [8, 0], sizes = [8, 8], strides = [1, 1]} : vector<32x8xf32> to vector<8x8xf32>
    %cst_35 = arith.constant dense<0.000000e+00> : vector<8x8xf32>
    %56 = tpu.matmul %53, %54, %cst_35 {dimension_numbers = #tpu.dot_dimension_numbers<[1], [1], [0], [0], [0, 0, 1, 0], [], []>} : vector<8x8xf32>, vector<8x8xf32>, vector<8x8xf32> -> vector<8x8xf32>
    %57 = arith.mulf %56, %32 : vector<8x8xf32>
    %cst_36 = arith.constant -1.000000e+07 : f32
    %58 = vector.broadcast %cst_36 : f32 to vector<8x8xf32>
    %59 = arith.select %31, %58, %57 : vector<8x8xi1>, vector<8x8xf32>
    %60 = math.absf %59 : vector<8x8xf32>
    %cst_37 = arith.constant dense<0xFF800000> : vector<8xf32>
    %61 = vector.multi_reduction <maximumf>, %60, %cst_37 [1] : vector<8x8xf32> to vector<8xf32>
    %62 = vector.shape_cast %61 : vector<8xf32> to vector<8x1xf32>
    %63 = vector.broadcast %62 : vector<8x1xf32> to vector<8x8xf32>
    %64 = arith.subf %60, %63 : vector<8x8xf32>
    %65 = math.exp %64 : vector<8x8xf32>
    %cst_38 = arith.constant dense<0.000000e+00> : vector<8xf32>
    %66 = vector.multi_reduction <add>, %65, %cst_38 [1] : vector<8x8xf32> to vector<8xf32>
    %67 = vector.shape_cast %66 : vector<8xf32> to vector<8x1xf32>
    %68 = tpu.reciprocal %67 : vector<8x1xf32> -> vector<8x1xf32>
    %69 = vector.broadcast %68 : vector<8x1xf32> to vector<8x8xf32>
    %70 = arith.mulf %65, %69 : vector<8x8xf32>
    %cst_39 = arith.constant dense<0.000000e+00> : vector<8x8xf32>
    %71 = tpu.matmul %70, %55, %cst_39 {dimension_numbers = #tpu.dot_dimension_numbers<[1], [0], [0], [1], [0, 0, 1, 1], [], []>} : vector<8x8xf32>, vector<8x8xf32>, vector<8x8xf32> -> vector<8x8xf32>
    %c0_40 = arith.constant 0 : index
    %c8 = arith.constant 8 : index
    %72 = vector.load %arg10[%c0_40, %c8] : memref<8x32xf32, #tpu.memory_space<vmem>>, vector<8x8xf32>
    tpu.vector_store %arg10[%c0_40, %c8], %71 {strides = array<i32>} : memref<8x32xf32, #tpu.memory_space<vmem>>, vector<8x8xf32>,
    %73 = vector.extract_strided_slice %12 {offsets = [16, 0], sizes = [8, 8], strides = [1, 1]} : vector<32x8xf32> to vector<8x8xf32>
    %74 = vector.extract_strided_slice %19 {offsets = [16, 0], sizes = [8, 8], strides = [1, 1]} : vector<32x8xf32> to vector<8x8xf32>
    %75 = vector.extract_strided_slice %26 {offsets = [16, 0], sizes = [8, 8], strides = [1, 1]} : vector<32x8xf32> to vector<8x8xf32>
    %cst_41 = arith.constant dense<0.000000e+00> : vector<8x8xf32>
    %76 = tpu.matmul %73, %74, %cst_41 {dimension_numbers = #tpu.dot_dimension_numbers<[1], [1], [0], [0], [0, 0, 1, 0], [], []>} : vector<8x8xf32>, vector<8x8xf32>, vector<8x8xf32> -> vector<8x8xf32>
    %77 = arith.mulf %76, %32 : vector<8x8xf32>
    %cst_42 = arith.constant -1.000000e+07 : f32
    %78 = vector.broadcast %cst_42 : f32 to vector<8x8xf32>
    %79 = arith.select %31, %78, %77 : vector<8x8xi1>, vector<8x8xf32>
    %80 = math.absf %79 : vector<8x8xf32>
    %cst_43 = arith.constant dense<0xFF800000> : vector<8xf32>
    %81 = vector.multi_reduction <maximumf>, %80, %cst_43 [1] : vector<8x8xf32> to vector<8xf32>
    %82 = vector.shape_cast %81 : vector<8xf32> to vector<8x1xf32>
    %83 = vector.broadcast %82 : vector<8x1xf32> to vector<8x8xf32>
    %84 = arith.subf %80, %83 : vector<8x8xf32>
    %85 = math.exp %84 : vector<8x8xf32>
    %cst_44 = arith.constant dense<0.000000e+00> : vector<8xf32>
    %86 = vector.multi_reduction <add>, %85, %cst_44 [1] : vector<8x8xf32> to vector<8xf32>
    %87 = vector.shape_cast %86 : vector<8xf32> to vector<8x1xf32>
    %88 = tpu.reciprocal %87 : vector<8x1xf32> -> vector<8x1xf32>
    %89 = vector.broadcast %88 : vector<8x1xf32> to vector<8x8xf32>
    %90 = arith.mulf %85, %89 : vector<8x8xf32>
    %cst_45 = arith.constant dense<0.000000e+00> : vector<8x8xf32>
    %91 = tpu.matmul %90, %75, %cst_45 {dimension_numbers = #tpu.dot_dimension_numbers<[1], [0], [0], [1], [0, 0, 1, 1], [], []>} : vector<8x8xf32>, vector<8x8xf32>, vector<8x8xf32> -> vector<8x8xf32>
    %c0_46 = arith.constant 0 : index
    %c16 = arith.constant 16 : index
    %92 = vector.load %arg10[%c0_46, %c16] : memref<8x32xf32, #tpu.memory_space<vmem>>, vector<8x8xf32>
    tpu.vector_store %arg10[%c0_46, %c16], %91 {strides = array<i32>} : memref<8x32xf32, #tpu.memory_space<vmem>>, vector<8x8xf32>,
    %93 = vector.extract_strided_slice %12 {offsets = [24, 0], sizes = [8, 8], strides = [1, 1]} : vector<32x8xf32> to vector<8x8xf32>
    %94 = vector.extract_strided_slice %19 {offsets = [24, 0], sizes = [8, 8], strides = [1, 1]} : vector<32x8xf32> to vector<8x8xf32>
    %95 = vector.extract_strided_slice %26 {offsets = [24, 0], sizes = [8, 8], strides = [1, 1]} : vector<32x8xf32> to vector<8x8xf32>
    %cst_47 = arith.constant dense<0.000000e+00> : vector<8x8xf32>
    %96 = tpu.matmul %93, %94, %cst_47 {dimension_numbers = #tpu.dot_dimension_numbers<[1], [1], [0], [0], [0, 0, 1, 0], [], []>} : vector<8x8xf32>, vector<8x8xf32>, vector<8x8xf32> -> vector<8x8xf32>
    %97 = arith.mulf %96, %32 : vector<8x8xf32>
    %cst_48 = arith.constant -1.000000e+07 : f32
    %98 = vector.broadcast %cst_48 : f32 to vector<8x8xf32>
    %99 = arith.select %31, %98, %97 : vector<8x8xi1>, vector<8x8xf32>
    %100 = math.absf %99 : vector<8x8xf32>
    %cst_49 = arith.constant dense<0xFF800000> : vector<8xf32>
    %101 = vector.multi_reduction <maximumf>, %100, %cst_49 [1] : vector<8x8xf32> to vector<8xf32>
    %102 = vector.shape_cast %101 : vector<8xf32> to vector<8x1xf32>
    %103 = vector.broadcast %102 : vector<8x1xf32> to vector<8x8xf32>
    %104 = arith.subf %100, %103 : vector<8x8xf32>
    %105 = math.exp %104 : vector<8x8xf32>
    %cst_50 = arith.constant dense<0.000000e+00> : vector<8xf32>
    %106 = vector.multi_reduction <add>, %105, %cst_50 [1] : vector<8x8xf32> to vector<8xf32>
    %107 = vector.shape_cast %106 : vector<8xf32> to vector<8x1xf32>
    %108 = tpu.reciprocal %107 : vector<8x1xf32> -> vector<8x1xf32>
    %109 = vector.broadcast %108 : vector<8x1xf32> to vector<8x8xf32>
    %110 = arith.mulf %105, %109 : vector<8x8xf32>
    %cst_51 = arith.constant dense<0.000000e+00> : vector<8x8xf32>
    %111 = tpu.matmul %110, %95, %cst_51 {dimension_numbers = #tpu.dot_dimension_numbers<[1], [0], [0], [1], [0, 0, 1, 1], [], []>} : vector<8x8xf32>, vector<8x8xf32>, vector<8x8xf32> -> vector<8x8xf32>
    %c0_52 = arith.constant 0 : index
    %c24 = arith.constant 24 : index
    %112 = vector.load %arg10[%c0_52, %c24] : memref<8x32xf32, #tpu.memory_space<vmem>>, vector<8x8xf32>
    tpu.vector_store %arg10[%c0_52, %c24], %111 {strides = array<i32>} : memref<8x32xf32, #tpu.memory_space<vmem>>, vector<8x8xf32>,
    %c0_53 = arith.constant 0 : index
    %c0_54 = arith.constant 0 : index
    %113 = vector.load %arg10[%c0_53, %c0_54] : memref<8x32xf32, #tpu.memory_space<vmem>>, vector<8x32xf32>
    %c3 = arith.constant 3 : index
    %c0_55 = arith.constant 0 : index
    %c0_56 = arith.constant 0 : index
    %114 = vector.load %arg5[%c3, %c0_55, %c0_56] : memref<4x32x32xf32, #tpu.memory_space<vmem>>, vector<1x32x32xf32>
    %115 = vector.shape_cast %114 : vector<1x32x32xf32> to vector<32x32xf32>
    %cst_57 = arith.constant dense<0.000000e+00> : vector<8x32xf32>
    %116 = tpu.matmul %113, %115, %cst_57 {dimension_numbers = #tpu.dot_dimension_numbers<[1], [1], [0], [0], [0, 0, 1, 0], [], []>} : vector<8x32xf32>, vector<32x32xf32>, vector<8x32xf32> -> vector<8x32xf32>
    %c0_58 = arith.constant 0 : index
    %c0_59 = arith.constant 0 : index
    %117 = vector.load %arg7[%c0_58, %c0_59] : memref<1x32xf32, #tpu.memory_space<vmem>>, vector<1x32xf32>
    %118 = vector.broadcast %117 : vector<1x32xf32> to vector<8x32xf32>
    %119 = arith.addf %116, %118 : vector<8x32xf32>
    %120 = arith.addf %119, %1 : vector<8x32xf32>
    %c0_60 = arith.constant 0 : index
    %c0_61 = arith.constant 0 : index
    %c0_62 = arith.constant 0 : index
    %121 = vector.load %arg9[%c0_60, %c0_61, %c0_62] : memref<1x8x32xf32, #tpu.memory_space<vmem>>, vector<1x8x32xf32>
    %122 = vector.shape_cast %121 : vector<1x8x32xf32> to vector<8x32xf32>
    %123 = vector.shape_cast %120 : vector<8x32xf32> to vector<1x8x32xf32>
    tpu.vector_store %arg9[%c0_60, %c0_61, %c0_62], %123 {strides = array<i32>} : memref<1x8x32xf32, #tpu.memory_space<vmem>>, vector<1x8x32xf32>,
    return
  }
  func.func @transform_0(%arg0: i32, %arg1: memref<2xi32, #tpu.memory_space<smem>>) -> (i32, i32, i32) {
    %c0_i32 = arith.constant 0 : i32
    %c0_i32_0 = arith.constant 0 : i32
    %c0_i32_1 = arith.constant 0 : i32
    return %arg0, %c0_i32, %c0_i32_0 : i32, i32, i32
  }
  func.func @transform_1(%arg0: i32, %arg1: memref<2xi32, #tpu.memory_space<smem>>) -> (i32, i32, i32) {
    %c0_i32 = arith.constant 0 : i32
    %c0_i32_0 = arith.constant 0 : i32
    %c0_i32_1 = arith.constant 0 : i32
    return %arg0, %c0_i32, %c0_i32_0 : i32, i32, i32
  }
  func.func @transform_2(%arg0: i32, %arg1: memref<2xi32, #tpu.memory_space<smem>>) -> (i32, i32, i32) {
    %c0_i32 = arith.constant 0 : i32
    %c0_i32_0 = arith.constant 0 : i32
    %c0_i32_1 = arith.constant 0 : i32
    return %arg0, %c0_i32, %c0_i32_0 : i32, i32, i32
  }
  func.func @transform_3(%arg0: i32, %arg1: memref<2xi32, #tpu.memory_space<smem>>) -> (i32, i32, i32) {
    %c0_i32 = arith.constant 0 : i32
    %c0_i32_0 = arith.constant 0 : i32
    %c0_i32_1 = arith.constant 0 : i32
    %c0_i32_2 = arith.constant 0 : i32
    return %c0_i32, %c0_i32_0, %c0_i32_1 : i32, i32, i32
  }
  func.func @transform_4(%arg0: i32, %arg1: memref<2xi32, #tpu.memory_space<smem>>) -> (i32, i32, i32) {
    %c0_i32 = arith.constant 0 : i32
    %c0_i32_0 = arith.constant 0 : i32
    %c0_i32_1 = arith.constant 0 : i32
    %c0_i32_2 = arith.constant 0 : i32
    return %c0_i32, %c0_i32_0, %c0_i32_1 : i32, i32, i32
  }
  func.func @transform_5(%arg0: i32, %arg1: memref<2xi32, #tpu.memory_space<smem>>) -> (i32, i32) {
    %c0_i32 = arith.constant 0 : i32
    %c0_i32_0 = arith.constant 0 : i32
    %c0_i32_1 = arith.constant 0 : i32
    return %c0_i32, %c0_i32_0 : i32, i32
  }
  func.func @transform_6(%arg0: i32, %arg1: memref<2xi32, #tpu.memory_space<smem>>) -> (i32, i32) {
    %c0_i32 = arith.constant 0 : i32
    %c0_i32_0 = arith.constant 0 : i32
    %c0_i32_1 = arith.constant 0 : i32
    return %c0_i32, %c0_i32_0 : i32, i32
  }
  func.func @transform_7(%arg0: i32, %arg1: memref<2xi32, #tpu.memory_space<smem>>) -> (i32, i32, i32) {
    %c0_i32 = arith.constant 0 : i32
    %c0_i32_0 = arith.constant 0 : i32
    %c0_i32_1 = arith.constant 0 : i32
    return %arg0, %c0_i32, %c0_i32_0 : i32, i32, i32
  }
}

</mosaic_0001>

<llo_original>
// kernel: tpu_custom_call.1
$region0: #{tpu_custom_call.1}
  #allocation0 [shape = 'u32[]', space=smem, size = 0x4, offset = 0x4, fixed_abs, tag = 'smem constant byte address 0x4 - core index']
  #allocation1 [shape = 'u32[72,128]{1,0:T(1,128)}', space=vmem, size = 0x9000, scoped, tag = 'internal scratch']
  #allocation2 [shape = 'f32[8,32]{1,0:T(8,128)}', space=vmem, size = 0x1000, scoped, tag = 'scratch operand']
  #allocation3 [shape = 's32[1]{0}', space=sflag, size = 0x4, scoped, tag = 'scoped memory for tpu_custom_call.1']
  #allocation4 [shape = 'u8[512]{0}', space=smem, size = 0x200, scoped, tag = 'prefetched SMEM operand 0']
  %s0 = inlined_call_operand.vmem [shape: s32[2], index: 0, kind: input, shape index: {}]
  %s1 = inlined_call_operand.vmem [shape: f32[2,8,32], index: 1, kind: input, shape index: {}]
  %s2 = inlined_call_operand.vmem [shape: f32[2,8,32], index: 2, kind: input, shape index: {}]
  %s3 = inlined_call_operand.vmem [shape: f32[2,8,32], index: 3, kind: input, shape index: {}]
  %s4 = inlined_call_operand.hbm [shape: f32[4,32,32], index: 4, kind: input, shape index: {}]
  %s5 = inlined_call_operand.vmem [shape: f32[3,32,1], index: 5, kind: input, shape index: {}]
  %s6 = inlined_call_operand.vmem [shape: f32[1,32], index: 6, kind: input, shape index: {}]
  %s7 = inlined_call_operand.vmem [shape: f32[8,8], index: 7, kind: input, shape index: {}]
  %s8 = inlined_call_operand.hbm [shape: f32[2,8,32], index: 8, kind: output, shape index: {}]
  %s9 = sld [smem:[#allocation0]]
  $region65: #{tpu_custom_call.1} parent=0
    _
  %s11 = ssub.s32 1, %s9
  %s12 = scalar_select 0, %s11, %s9
  %s14 = sshll.u32 %s0, 4
  %s15 = int_to_ptr.vmem [resolvable:$true] %s14
  %17 = dma.vmem_to_smem %s15, 16, [#allocation4], [#allocation3]
  %19 = dma.done [#allocation3], 16
  %20 = sfence
  $region1: #{tpu_custom_call.1} parent=0
    #allocation5 [shape = 'u8[65536]{0}', space=vmem, size = 0x10000, scoped, tag = 'input window, operand 4, single buffered']
    #allocation6 [shape = 's32[2]{0}', space=sflag, size = 0x8, scoped, tag = 'scoped memory for tpu_custom_call.1']
    #allocation7 [shape = 's32[2]{0}', space=sflag, size = 0x8, scoped, tag = 'scoped memory for tpu_custom_call.1']
    #allocation8 [shape = 'u8[8192]{0}', space=vmem, size = 0x2000, scoped, tag = 'output window, operand 0']
    %21 = vsyncpa [#allocation6], 0
    %22 = vsyncpa [#allocation7], 0
    %s23 = scalar_lea.sflag [#allocation7], 1
    %24 = vsyncpa %s23, 0
    loop: start=0, step=1, limit=4
    $region2: #{tpu_custom_call.1} parent=1 // loop_pre_header
      _
    $region3: #{tpu_custom_call.1} parent=1 // loop_header
      %s26 = sphi 0, %s30
      %p27 = scmp.ge.s32.totalorder %s26, 4
      %s36 = sphi 0, %s38
      %s39 = sphi 0, %s36
      %s40 = sphi 0, %s39
      %s56 = sphi 0, %s40
      %s62 = sphi 0, %s64
      %s65 = sphi 0, %s62
      %s66 = sphi 0, %s65
      %s82 = sphi 0, %s66
      %s88 = sphi 0, %s90
      %s91 = sphi 0, %s88
      %s92 = sphi 0, %s91
      %s108 = sphi 0, %s92
      %s112 = sphi 0, %s112
      %s114 = sphi 0, %s112
      %s115 = sphi 0, %s114
      %s129 = sphi 0, %s115
      %s133 = sphi 0, %s133
      %s135 = sphi 0, %s133
      %s136 = sphi 0, %s135
      %s150 = sphi 0, %s136
      %s154 = sphi 0, %s154
      %s156 = sphi 0, %s154
      %s157 = sphi 0, %s156
      %s171 = sphi 0, %s157
      %s175 = sphi 0, %s175
      %s177 = sphi 0, %s175
      %s178 = sphi 0, %s177
      %s192 = sphi 0, %s178
      %s198 = sphi 0, %s200
      %s201 = sphi 0, %s198
      %s202 = sphi 0, %s201
      %s218 = sphi 0, %s202
    $region4: #{tpu_custom_call.1} parent=1 // loop_header_branch
      %29 = sbr.rel (%p27) target = $region8
    $region5: #{tpu_custom_call.1} parent=1 // loop_body
      %s31 = ssub.s32 %s26, 1
      %s32 = ssub.s32 %s26, 2
      %s33 = sadd.s32 %s26, 1
      %s34 = ssub.s32 %s26, %s33
      %p35 = scmp.eq.s32.totalorder %s34, 0
      %s37 = sadd.s32 %s36, 1
      %s38 = scalar_select %p35, %s36, %s37
      %p41 = pneg %p35
      %p42 = scmp.eq.s32.totalorder %s26, 1
      %p43 = por %p41, %p42
      %p44 = scmp.ne.s32.totalorder %s36, %s39
      %p45 = scmp.eq.s32.totalorder %s26, 0
      %p46 = por %p44, %p45
      %p47 = scmp.ne.s32.totalorder %s36, %s39
      %p48 = scmp.eq.s32.totalorder %s31, 1
      %p49 = por %p47, %p48
      %p50 = scmp.ne.s32.totalorder %s39, %s40
      %p51 = scmp.eq.s32.totalorder %s31, 0
      %p52 = por %p50, %p51
      %p53 = scmp.ne.s32.totalorder %s39, %s40
      %p54 = scmp.eq.s32.totalorder %s32, 1
      %p55 = por %p53, %p54
      %p57 = scmp.ne.s32.totalorder %s40, %s56
      %p58 = scmp.eq.s32.totalorder %s32, 0
      %p59 = por %p57, %p58
      %s60 = ssub.s32 %s26, %s33
      %p61 = scmp.eq.s32.totalorder %s60, 0
      %s63 = sadd.s32 %s62, 1
      %s64 = scalar_select %p61, %s62, %s63
      %p67 = pneg %p61
      %p68 = scmp.eq.s32.totalorder %s26, 1
      %p69 = por %p67, %p68
      %p70 = scmp.ne.s32.totalorder %s62, %s65
      %p71 = scmp.eq.s32.totalorder %s26, 0
      %p72 = por %p70, %p71
      %p73 = scmp.ne.s32.totalorder %s62, %s65
      %p74 = scmp.eq.s32.totalorder %s31, 1
      %p75 = por %p73, %p74
      %p76 = scmp.ne.s32.totalorder %s65, %s66
      %p77 = scmp.eq.s32.totalorder %s31, 0
      %p78 = por %p76, %p77
      %p79 = scmp.ne.s32.totalorder %s65, %s66
      %p80 = scmp.eq.s32.totalorder %s32, 1
      %p81 = por %p79, %p80
      %p83 = scmp.ne.s32.totalorder %s66, %s82
      %p84 = scmp.eq.s32.totalorder %s32, 0
      %p85 = por %p83, %p84
      %s86 = ssub.s32 %s26, %s33
      %p87 = scmp.eq.s32.totalorder %s86, 0
      %s89 = sadd.s32 %s88, 1
      %s90 = scalar_select %p87, %s88, %s89
      %p93 = pneg %p87
      %p94 = scmp.eq.s32.totalorder %s26, 1
      %p95 = por %p93, %p94
      %p96 = scmp.ne.s32.totalorder %s88, %s91
      %p97 = scmp.eq.s32.totalorder %s26, 0
      %p98 = por %p96, %p97
      %p99 = scmp.ne.s32.totalorder %s88, %s91
      %p100 = scmp.eq.s32.totalorder %s31, 1
      %p101 = por %p99, %p100
      %p102 = scmp.ne.s32.totalorder %s91, %s92
      %p103 = scmp.eq.s32.totalorder %s31, 0
      %p104 = por %p102, %p103
      %p105 = scmp.ne.s32.totalorder %s91, %s92
      %p106 = scmp.eq.s32.totalorder %s32, 1
      %p107 = por %p105, %p106
      %p109 = scmp.ne.s32.totalorder %s92, %s108
      %p110 = scmp.eq.s32.totalorder %s32, 0
      %p111 = por %p109, %p110
      %s113 = sadd.s32 %s112, 1
      %p116 = scmp.eq.s32.totalorder %s26, 1
      %p117 = scmp.ne.s32.totalorder %s112, %s114
      %p118 = scmp.eq.s32.totalorder %s26, 0
      %p119 = por %p117, %p118
      %p120 = scmp.ne.s32.totalorder %s112, %s114
      %p121 = scmp.eq.s32.totalorder %s31, 1
      %p122 = por %p120, %p121
      %p123 = scmp.ne.s32.totalorder %s114, %s115
      %p124 = scmp.eq.s32.totalorder %s31, 0
      %p125 = por %p123, %p124
      %p126 = scmp.ne.s32.totalorder %s114, %s115
      %p127 = scmp.eq.s32.totalorder %s32, 1
      %p128 = por %p126, %p127
      %p130 = scmp.ne.s32.totalorder %s115, %s129
      %p131 = scmp.eq.s32.totalorder %s32, 0
      %p132 = por %p130, %p131
      %s134 = sadd.s32 %s133, 1
      %p137 = scmp.eq.s32.totalorder %s26, 1
      %p138 = scmp.ne.s32.totalorder %s133, %s135
      %p139 = scmp.eq.s32.totalorder %s26, 0
      %p140 = por %p138, %p139
      %p141 = scmp.ne.s32.totalorder %s133, %s135
      %p142 = scmp.eq.s32.totalorder %s31, 1
      %p143 = por %p141, %p142
      %p144 = scmp.ne.s32.totalorder %s135, %s136
      %p145 = scmp.eq.s32.totalorder %s31, 0
      %p146 = por %p144, %p145
      %p147 = scmp.ne.s32.totalorder %s135, %s136
      %p148 = scmp.eq.s32.totalorder %s32, 1
      %p149 = por %p147, %p148
      %p151 = scmp.ne.s32.totalorder %s136, %s150
      %p152 = scmp.eq.s32.totalorder %s32, 0
      %p153 = por %p151, %p152
      %s155 = sadd.s32 %s154, 1
      %p158 = scmp.eq.s32.totalorder %s26, 1
      %p159 = scmp.ne.s32.totalorder %s154, %s156
      %p160 = scmp.eq.s32.totalorder %s26, 0
      %p161 = por %p159, %p160
      %p162 = scmp.ne.s32.totalorder %s154, %s156
      %p163 = scmp.eq.s32.totalorder %s31, 1
      %p164 = por %p162, %p163
      %p165 = scmp.ne.s32.totalorder %s156, %s157
      %p166 = scmp.eq.s32.totalorder %s31, 0
      %p167 = por %p165, %p166
      %p168 = scmp.ne.s32.totalorder %s156, %s157
      %p169 = scmp.eq.s32.totalorder %s32, 1
      %p170 = por %p168, %p169
      %p172 = scmp.ne.s32.totalorder %s157, %s171
      %p173 = scmp.eq.s32.totalorder %s32, 0
      %p174 = por %p172, %p173
      %s176 = sadd.s32 %s175, 1
      %p179 = scmp.eq.s32.totalorder %s26, 1
      %p180 = scmp.ne.s32.totalorder %s175, %s177
      %p181 = scmp.eq.s32.totalorder %s26, 0
      %p182 = por %p180, %p181
      %p183 = scmp.ne.s32.totalorder %s175, %s177
      %p184 = scmp.eq.s32.totalorder %s31, 1
      %p185 = por %p183, %p184
      %p186 = scmp.ne.s32.totalorder %s177, %s178
      %p187 = scmp.eq.s32.totalorder %s31, 0
      %p188 = por %p186, %p187
      %p189 = scmp.ne.s32.totalorder %s177, %s178
      %p190 = scmp.eq.s32.totalorder %s32, 1
      %p191 = por %p189, %p190
      %p193 = scmp.ne.s32.totalorder %s178, %s192
      %p194 = scmp.eq.s32.totalorder %s32, 0
      %p195 = por %p193, %p194
      %s196 = ssub.s32 %s26, %s33
      %p197 = scmp.eq.s32.totalorder %s196, 0
      %s199 = sadd.s32 %s198, 1
      %s200 = scalar_select %p197, %s198, %s199
      %p203 = pneg %p197
      %p204 = scmp.eq.s32.totalorder %s26, 1
      %p205 = por %p203, %p204
      %p206 = scmp.ne.s32.totalorder %s198, %s201
      %p207 = scmp.eq.s32.totalorder %s26, 0
      %p208 = por %p206, %p207
      %p209 = scmp.ne.s32.totalorder %s198, %s201
      %p210 = scmp.eq.s32.totalorder %s31, 1
      %p211 = por %p209, %p210
      %p212 = scmp.ne.s32.totalorder %s201, %s202
      %p213 = scmp.eq.s32.totalorder %s31, 0
      %p214 = por %p212, %p213
      %p215 = scmp.ne.s32.totalorder %s201, %s202
      %p216 = scmp.eq.s32.totalorder %s32, 1
      %p217 = por %p215, %p216
      %p219 = scmp.ne.s32.totalorder %s202, %s218
      %p220 = scmp.eq.s32.totalorder %s32, 0
      %p221 = por %p219, %p220
      %p222 = scmp.le.s32.totalorder 1, %s26
      %p223 = scmp.lt.s32.totalorder %s26, 3
      %p224 = pnand %p222, %p223
      %p225 = pneg %p224
      // Predicated region
      $region9: #{tpu_custom_call.1} parent=5 // pred_check
        _
      $region10: #{tpu_custom_call.1} parent=5 // pred_check_branch
        %227 = sbr.rel (%p224) target = $region12
      $region11: #{tpu_custom_call.1} parent=5 // pred_region
        %s228 = ssub.s32 %s26, 1
        // Predicated region
        $region13: #{tpu_custom_call.1} parent=11 // pred_check
          %p229 = pneg %p125
        $region14: #{tpu_custom_call.1} parent=11 // pred_check_branch
          %231 = sbr.rel (%p229) target = $region16
        $region15: #{tpu_custom_call.1} parent=11 // pred_region
          %233 = vsyncadd [#allocation6], 0
          %s234 = sshll.u32 %s4, 4
          %s235 = int_to_ptr.hbm [resolvable:$true] %s234
          %s236 = sshll.u32 [#allocation5], 4
          %s237 = int_to_ptr.vmem [resolvable:$true] %s236
          %242 = dma.hbm_to_vmem [thread:$0]  %s235, 2048, %s237, [#allocation6], 128, 128, 8
        $region16: #{tpu_custom_call.1} parent=11 // pred_fallthru
          _
        // Predicated region
        $region17: #{tpu_custom_call.1} parent=11 // pred_check
          %p243 = pneg %p146
        $region18: #{tpu_custom_call.1} parent=11 // pred_check_branch
          %245 = sbr.rel (%p243) target = $region20
        $region19: #{tpu_custom_call.1} parent=11 // pred_region
          _
        $region20: #{tpu_custom_call.1} parent=11 // pred_fallthru
          _
        // Predicated region
        $region21: #{tpu_custom_call.1} parent=11 // pred_check
          %p246 = pneg %p167
        $region22: #{tpu_custom_call.1} parent=11 // pred_check_branch
          %248 = sbr.rel (%p246) target = $region24
        $region23: #{tpu_custom_call.1} parent=11 // pred_region
          _
        $region24: #{tpu_custom_call.1} parent=11 // pred_fallthru
          _
        // Predicated region
        $region25: #{tpu_custom_call.1} parent=11 // pred_check
          %p249 = pneg %p188
        $region26: #{tpu_custom_call.1} parent=11 // pred_check_branch
          %251 = sbr.rel (%p249) target = $region28
        $region27: #{tpu_custom_call.1} parent=11 // pred_region
          _
        $region28: #{tpu_custom_call.1} parent=11 // pred_fallthru
          _
      $region12: #{tpu_custom_call.1} parent=5 // pred_fallthru
        _
      %p252 = scmp.lt.s32.totalorder %s26, 2
      // Predicated region
      $region29: #{tpu_custom_call.1} parent=5 // pred_check
        %p253 = pneg %p252
      $region30: #{tpu_custom_call.1} parent=5 // pred_check_branch
        %255 = sbr.rel (%p253) target = $region32
      $region31: #{tpu_custom_call.1} parent=5 // pred_region
        // Predicated region
        $region33: #{tpu_custom_call.1} parent=31 // pred_check
          %p256 = pneg %p46
        $region34: #{tpu_custom_call.1} parent=31 // pred_check_branch
          %258 = sbr.rel (%p256) target = $region36
        $region35: #{tpu_custom_call.1} parent=31 // pred_region
          %p259 = scmp.lt.s32.totalorder %s26, 1
          %s260 = scalar_select %p259, %s26, 1
          %s261 = smul.addr %s260, 8
          %s262 = scalar_lea.vmem %s1, %s261
        $region36: #{tpu_custom_call.1} parent=31 // pred_fallthru
          _
        // Predicated region
        $region37: #{tpu_custom_call.1} parent=31 // pred_check
          %p263 = pneg %p72
        $region38: #{tpu_custom_call.1} parent=31 // pred_check_branch
          %265 = sbr.rel (%p263) target = $region40
        $region39: #{tpu_custom_call.1} parent=31 // pred_region
          %p266 = scmp.lt.s32.totalorder %s26, 1
          %s267 = scalar_select %p266, %s26, 1
          %s268 = smul.addr %s267, 8
          %s269 = scalar_lea.vmem %s2, %s268
        $region40: #{tpu_custom_call.1} parent=31 // pred_fallthru
          _
        // Predicated region
        $region41: #{tpu_custom_call.1} parent=31 // pred_check
          %p270 = pneg %p98
        $region42: #{tpu_custom_call.1} parent=31 // pred_check_branch
          %272 = sbr.rel (%p270) target = $region44
        $region43: #{tpu_custom_call.1} parent=31 // pred_region
          %p273 = scmp.lt.s32.totalorder %s26, 1
          %s274 = scalar_select %p273, %s26, 1
          %s275 = smul.addr %s274, 8
          %s276 = scalar_lea.vmem %s3, %s275
        $region44: #{tpu_custom_call.1} parent=31 // pred_fallthru
          _
      $region32: #{tpu_custom_call.1} parent=5 // pred_fallthru
        _
      %p277 = scmp.le.s32.totalorder 1, %s26
      %p278 = scmp.lt.s32.totalorder %s26, 3
      %p279 = pnand %p277, %p278
      %p280 = pneg %p279
      // Predicated region
      $region45: #{tpu_custom_call.1} parent=5 // pred_check
        _
      $region46: #{tpu_custom_call.1} parent=5 // pred_check_branch
        %282 = sbr.rel (%p279) target = $region48
      $region47: #{tpu_custom_call.1} parent=5 // pred_region
        %s283 = ssub.s32 %s26, 1
        // Predicated region
        $region49: #{tpu_custom_call.1} parent=47 // pred_check
          %p284 = pneg %p125
        $region50: #{tpu_custom_call.1} parent=47 // pred_check_branch
          %286 = sbr.rel (%p284) target = $region52
        $region51: #{tpu_custom_call.1} parent=47 // pred_region
          %288 = dma.done [#allocation6], 2048
        $region52: #{tpu_custom_call.1} parent=47 // pred_fallthru
          _
        %p289 = scmp.lt.s32.totalorder %s31, 1
        %s290 = scalar_select %p289, %s31, 1
        %s291 = smul.addr %s290, 8
        %s292 = scalar_lea.vmem %s1, %s291
        %p293 = pneg %p52
        %p294 = pneg %p49
        %p295 = scmp.lt.s32.totalorder %s31, 1
        %s296 = scalar_select %p295, %s31, 1
        %s297 = smul.addr %s296, 8
        %s298 = scalar_lea.vmem %s2, %s297
        %p299 = pneg %p78
        %p300 = pneg %p75
        %p301 = scmp.lt.s32.totalorder %s31, 1
        %s302 = scalar_select %p301, %s31, 1
        %s303 = smul.addr %s302, 8
        %s304 = scalar_lea.vmem %s3, %s303
        %p305 = pneg %p104
        %p306 = pneg %p101
        %p307 = pneg %p125
        %p308 = pneg %p122
        %p309 = pneg %p146
        %p310 = pneg %p143
        %p311 = pneg %p167
        %p312 = pneg %p164
        %p313 = pneg %p188
        %p314 = pneg %p185
        %p315 = pneg %p214
        %p316 = pneg %p211
        %s317 = sand.u32 %s201, 1
        %s318 = scalar_lea.sflag [#allocation7], %s317
        %s319 = sand.u32 %s201, 1
        %s320 = smul.addr %s319, 8
        %s321 = scalar_lea.vmem [#allocation8], %s320
        %p322 = scmp.lt.s32.totalorder %s31, 1
        %s323 = scalar_select %p322, %s31, 1
        %s324 = smul.addr %s323, 8
        %s325 = scalar_lea.vmem %s1, %s324
        %p326 = scmp.lt.s32.totalorder %s31, 1
        %s327 = scalar_select %p326, %s31, 1
        %s328 = smul.addr %s327, 8
        %s329 = scalar_lea.vmem %s2, %s328
        %p330 = scmp.lt.s32.totalorder %s31, 1
        %s331 = scalar_select %p330, %s31, 1
        %s332 = smul.addr %s331, 8
        %s333 = scalar_lea.vmem %s3, %s332
        %v334 = vld [vmem:[%s325] sm:$0xff]
        %v335 = vld [vmem:[%s329] sm:$0xff]
        %v336 = vld [vmem:[%s333] sm:$0xff]
        %v337 = vld [vmem:[#allocation5] sm:$0xff]
        %v338 = vld [vmem:[#allocation5 + $0x8] sm:$0xff]
        %v339 = vld [vmem:[#allocation5 + $0x10] sm:$0xff]
        %v340 = vld [vmem:[#allocation5 + $0x18] sm:$0xff]
        %v341 = vld [vmem:[%s5] sm:$0xff]
        %v342 = vld [vmem:[%s5 + $0x8] sm:$0xff]
        %v343 = vld [vmem:[%s5 + $0x10] sm:$0xff]
        %v344 = vld [vmem:[%s5 + $0x18] sm:$0xff]
        %346 = vset.pattern.permute.xlu0 0
        %347 = vperm.xlu0 %346, %v341
        %v348 = vpop.permute.xlu0 %347
        %351 = vset.pattern.permute.xlu0 0
        %352 = vperm.xlu0 %351, %v342
        %v353 = vpop.permute.xlu0 %352
        %356 = vset.pattern.permute.xlu0 0
        %357 = vperm.xlu0 %356, %v343
        %v358 = vpop.permute.xlu0 %357
        %361 = vset.pattern.permute.xlu0 0
        %362 = vperm.xlu0 %361, %v344
        %v363 = vpop.permute.xlu0 %362
        %vm365 = vcmask 261120
        %v367 = vsel %vm365, %v337, 0
        %v370 = vsel %vm365, %v338, 0
        %v373 = vsel %vm365, %v339, 0
        %v376 = vsel %vm365, %v340, 0
        %v379 = vsel %vm365, %v334, 0
        %381 = vmatpush.xpose.msra.mxu0 0.0
        %382 = vmatpush.xpose.msra.mxu0 0.0
        %383 = vmatpush.xpose.msra.mxu0 0.0
        %384 = vmatpush.xpose.msra.mxu0 0.0
        %385 = vmatpush.xpose.msra.mxu0 0.0
        %386 = vmatpush.xpose.msra.mxu0 0.0
        %387 = vmatpush.xpose.msra.mxu0 0.0
        %388 = vmatpush.xpose.msra.mxu0 0.0
        %389 = vmatpush.xpose.msra.mxu0 0.0
        %390 = vmatpush.xpose.msra.mxu0 0.0
        %391 = vmatpush.xpose.msra.mxu0 0.0
        %392 = vmatpush.xpose.msra.mxu0 0.0
        %393 = vmatpush.xpose.msra.mxu0 0.0
        %394 = vmatpush.xpose.msra.mxu0 0.0
        %395 = vmatpush.xpose.msra.mxu0 0.0
        %396 = vmatpush.xpose.msra.mxu0 %v379
        %397 = vmatmul.f32.gmra.mxu0 %v367
        %v398 = vpop.f32.mrf.mxu0
        %v399 = vadd.f32 %v348, %v398
        %400 = vmatmul.f32.gmra.mxu0 %v370
        %v401 = vpop.f32.mrf.mxu0
        %v402 = vadd.f32 %v353, %v401
        %403 = vmatmul.f32.gmra.mxu0 %v373
        %v404 = vpop.f32.mrf.mxu0
        %v405 = vadd.f32 %v358, %v404
        %406 = vmatmul.f32.gmra.mxu0 %v376
        %v407 = vpop.f32.mrf.mxu0
        %v408 = vadd.f32 %v363, %v407
        %409 = vdwg.mxu0
        %s410 = scalar_lea.vmem [#allocation5], 32
        %v411 = vld [vmem:[%s410] sm:$0xff]
        %v412 = vld [vmem:[%s410 + $0x8] sm:$0xff]
        %v413 = vld [vmem:[%s410 + $0x10] sm:$0xff]
        %v414 = vld [vmem:[%s410 + $0x18] sm:$0xff]
        %s415 = scalar_lea.vmem %s5, 32
        %v416 = vld [vmem:[%s415] sm:$0xff]
        %v417 = vld [vmem:[%s415 + $0x8] sm:$0xff]
        %v418 = vld [vmem:[%s415 + $0x10] sm:$0xff]
        %v419 = vld [vmem:[%s415 + $0x18] sm:$0xff]
        %421 = vset.pattern.permute.xlu0 0
        %422 = vperm.xlu0 %421, %v416
        %v423 = vpop.permute.xlu0 %422
        %426 = vset.pattern.permute.xlu0 0
        %427 = vperm.xlu0 %426, %v417
        %v428 = vpop.permute.xlu0 %427
        %431 = vset.pattern.permute.xlu0 0
        %432 = vperm.xlu0 %431, %v418
        %v433 = vpop.permute.xlu0 %432
        %436 = vset.pattern.permute.xlu0 0
        %437 = vperm.xlu0 %436, %v419
        %v438 = vpop.permute.xlu0 %437
        %v441 = vsel %vm365, %v411, 0
        %v444 = vsel %vm365, %v412, 0
        %v447 = vsel %vm365, %v413, 0
        %v450 = vsel %vm365, %v414, 0
        %v453 = vsel %vm365, %v335, 0
        %455 = vmatpush.xpose.msra.mxu0 0.0
        %456 = vmatpush.xpose.msra.mxu0 0.0
        %457 = vmatpush.xpose.msra.mxu0 0.0
        %458 = vmatpush.xpose.msra.mxu0 0.0
        %459 = vmatpush.xpose.msra.mxu0 0.0
        %460 = vmatpush.xpose.msra.mxu0 0.0
        %461 = vmatpush.xpose.msra.mxu0 0.0
        %462 = vmatpush.xpose.msra.mxu0 0.0
        %463 = vmatpush.xpose.msra.mxu0 0.0
        %464 = vmatpush.xpose.msra.mxu0 0.0
        %465 = vmatpush.xpose.msra.mxu0 0.0
        %466 = vmatpush.xpose.msra.mxu0 0.0
        %467 = vmatpush.xpose.msra.mxu0 0.0
        %468 = vmatpush.xpose.msra.mxu0 0.0
        %469 = vmatpush.xpose.msra.mxu0 0.0
        %470 = vmatpush.xpose.msra.mxu0 %v453
        %471 = vmatmul.f32.gmra.mxu0 %v441
        %v472 = vpop.f32.mrf.mxu0
        %v473 = vadd.f32 %v423, %v472
        %474 = vmatmul.f32.gmra.mxu0 %v444
        %v475 = vpop.f32.mrf.mxu0
        %v476 = vadd.f32 %v428, %v475
        %477 = vmatmul.f32.gmra.mxu0 %v447
        %v478 = vpop.f32.mrf.mxu0
        %v479 = vadd.f32 %v433, %v478
        %480 = vmatmul.f32.gmra.mxu0 %v450
        %v481 = vpop.f32.mrf.mxu0
        %v482 = vadd.f32 %v438, %v481
        %483 = vdwg.mxu0
        %s484 = scalar_lea.vmem [#allocation5], 64
        %v485 = vld [vmem:[%s484] sm:$0xff]
        %v486 = vld [vmem:[%s484 + $0x8] sm:$0xff]
        %v487 = vld [vmem:[%s484 + $0x10] sm:$0xff]
        %v488 = vld [vmem:[%s484 + $0x18] sm:$0xff]
        %s489 = scalar_lea.vmem %s5, 64
        %v490 = vld [vmem:[%s489] sm:$0xff]
        %v491 = vld [vmem:[%s489 + $0x8] sm:$0xff]
        %v492 = vld [vmem:[%s489 + $0x10] sm:$0xff]
        %v493 = vld [vmem:[%s489 + $0x18] sm:$0xff]
        %495 = vset.pattern.permute.xlu0 0
        %496 = vperm.xlu0 %495, %v490
        %v497 = vpop.permute.xlu0 %496
        %500 = vset.pattern.permute.xlu0 0
        %501 = vperm.xlu0 %500, %v491
        %v502 = vpop.permute.xlu0 %501
        %505 = vset.pattern.permute.xlu0 0
        %506 = vperm.xlu0 %505, %v492
        %v507 = vpop.permute.xlu0 %506
        %510 = vset.pattern.permute.xlu0 0
        %511 = vperm.xlu0 %510, %v493
        %v512 = vpop.permute.xlu0 %511
        %v515 = vsel %vm365, %v485, 0
        %v518 = vsel %vm365, %v486, 0
        %v521 = vsel %vm365, %v487, 0
        %v524 = vsel %vm365, %v488, 0
        %v527 = vsel %vm365, %v336, 0
        %529 = vmatpush.xpose.msra.mxu0 0.0
        %530 = vmatpush.xpose.msra.mxu0 0.0
        %531 = vmatpush.xpose.msra.mxu0 0.0
        %532 = vmatpush.xpose.msra.mxu0 0.0
        %533 = vmatpush.xpose.msra.mxu0 0.0
        %534 = vmatpush.xpose.msra.mxu0 0.0
        %535 = vmatpush.xpose.msra.mxu0 0.0
        %536 = vmatpush.xpose.msra.mxu0 0.0
        %537 = vmatpush.xpose.msra.mxu0 0.0
        %538 = vmatpush.xpose.msra.mxu0 0.0
        %539 = vmatpush.xpose.msra.mxu0 0.0
        %540 = vmatpush.xpose.msra.mxu0 0.0
        %541 = vmatpush.xpose.msra.mxu0 0.0
        %542 = vmatpush.xpose.msra.mxu0 0.0
        %543 = vmatpush.xpose.msra.mxu0 0.0
        %544 = vmatpush.xpose.msra.mxu0 %v527
        %545 = vmatmul.f32.gmra.mxu0 %v515
        %v546 = vpop.f32.mrf.mxu0
        %v547 = vadd.f32 %v497, %v546
        %548 = vmatmul.f32.gmra.mxu0 %v518
        %v549 = vpop.f32.mrf.mxu0
        %v550 = vadd.f32 %v502, %v549
        %551 = vmatmul.f32.gmra.mxu0 %v521
        %v552 = vpop.f32.mrf.mxu0
        %v553 = vadd.f32 %v507, %v552
        %554 = vmatmul.f32.gmra.mxu0 %v524
        %v555 = vpop.f32.mrf.mxu0
        %v556 = vadd.f32 %v512, %v555
        %557 = vdwg.mxu0
        %s558 = sld [smem:[#allocation4 + %s31]]
        %v559 = vlaneseq
        %v560 = vshrl.u32 %v559, 7
        %v561 = vstv %s558
        %vm562 = vcmp.ge.s32.totalorder %v560, %v561
        %v563 = vld [vmem:[%s7] sm:$0xff]
        %vm564 = vcmask 64512
        %v566 = vsel %vm564, %v399, 0
        %v569 = vsel %vm564, %v473, 0
        %571 = vmatpush.xpose.msra.mxu0 0.0
        %572 = vmatpush.xpose.msra.mxu0 0.0
        %573 = vmatpush.xpose.msra.mxu0 0.0
        %574 = vmatpush.xpose.msra.mxu0 0.0
        %575 = vmatpush.xpose.msra.mxu0 0.0
        %576 = vmatpush.xpose.msra.mxu0 0.0
        %577 = vmatpush.xpose.msra.mxu0 0.0
        %578 = vmatpush.xpose.msra.mxu0 0.0
        %579 = vmatpush.xpose.msra.mxu0 0.0
        %580 = vmatpush.xpose.msra.mxu0 0.0
        %581 = vmatpush.xpose.msra.mxu0 0.0
        %582 = vmatpush.xpose.msra.mxu0 0.0
        %583 = vmatpush.xpose.msra.mxu0 0.0
        %584 = vmatpush.xpose.msra.mxu0 0.0
        %585 = vmatpush.xpose.msra.mxu0 0.0
        %586 = vmatpush.xpose.msra.mxu0 %v569
        %587 = vmatmul.f32.gmra.mxu0 %v566
        %v588 = vpop.f32.mrf.mxu0
        %v589 = vadd.f32 0.0, %v588
        %590 = vdwg.mxu0
        %v591 = vmul.f32 %v589, %v563
        %v592 = vsel %vm562, -10000000.0, %v591
        %v593 = vand.u32 2147483647, %v592
        %v594 = vsel %vm564, %v593, -inf
        %595 = vmax.xlane.f32.xlu0 %v594
        %v596 = vpop.xlane.xlu0 %595
        %v597 = vsub.f32 %v593, %v596
        %v598 = vmul.f32 %v597, 1.442695
        %v599 = vpow.pop %v598
        %v600 = vsel %vm564, %v599, 0.0
        %601 = vadd.xlane.f32.xlu0 %v600
        %v602 = vpop.xlane.xlu0 %601
        %v603 = vrcp.pop %v602
        %v604 = vmul.f32 %v602, %v603
        %v605 = vsub.f32 1.0, %v604
        %v606 = vmul.f32 %v603, %v605
        %v607 = vadd.f32 %v603, %v606
        %vm608 = vweird.f32 %v602
        %vm609 = vweird.f32 %v603
        %vm610 = vmor %vm608, %vm609
        %v611 = vsel %vm610, %v603, %v607
        %v612 = vand.u32 2147483647, %v602
        %vm613 = vcmp.eq.f32.partialorder %v612, 8.507059e+37
        %v614 = vand.u32 %v602, 2147483648
        %v615 = vor.u32 1.1754944e-38, %v614
        %v616 = vsel %vm613, %v615, %v611
        %v617 = vmul.f32 %v599, %v616
        %v619 = vsel %vm564, %v617, 0
        %621 = vmatpush.msra.mxu0 0.0
        %622 = vmatpush.msra.mxu0 0.0
        %623 = vmatpush.msra.mxu0 0.0
        %624 = vmatpush.msra.mxu0 0.0
        %625 = vmatpush.msra.mxu0 0.0
        %626 = vmatpush.msra.mxu0 0.0
        %627 = vmatpush.msra.mxu0 0.0
        %628 = vmatpush.msra.mxu0 0.0
        %629 = vmatpush.msra.mxu0 0.0
        %630 = vmatpush.msra.mxu0 0.0
        %631 = vmatpush.msra.mxu0 0.0
        %632 = vmatpush.msra.mxu0 0.0
        %633 = vmatpush.msra.mxu0 0.0
        %634 = vmatpush.msra.mxu0 0.0
        %635 = vmatpush.msra.mxu0 0.0
        %636 = vmatpush.msra.mxu0 %v547
        %637 = vmatmul.f32.gmra.mxu0 %v619
        %v638 = vpop.f32.mrf.mxu0
        %v639 = vadd.f32 0.0, %v638
        %640 = vdwg.mxu0
        %641 = vst.msk [vmem:[#allocation2] sm:$0xff] %vm564, %v639
        %v643 = vsel %vm564, %v402, 0
        %v646 = vsel %vm564, %v476, 0
        %648 = vmatpush.xpose.msra.mxu0 0.0
        %649 = vmatpush.xpose.msra.mxu0 0.0
        %650 = vmatpush.xpose.msra.mxu0 0.0
        %651 = vmatpush.xpose.msra.mxu0 0.0
        %652 = vmatpush.xpose.msra.mxu0 0.0
        %653 = vmatpush.xpose.msra.mxu0 0.0
        %654 = vmatpush.xpose.msra.mxu0 0.0
        %655 = vmatpush.xpose.msra.mxu0 0.0
        %656 = vmatpush.xpose.msra.mxu0 0.0
        %657 = vmatpush.xpose.msra.mxu0 0.0
        %658 = vmatpush.xpose.msra.mxu0 0.0
        %659 = vmatpush.xpose.msra.mxu0 0.0
        %660 = vmatpush.xpose.msra.mxu0 0.0
        %661 = vmatpush.xpose.msra.mxu0 0.0
        %662 = vmatpush.xpose.msra.mxu0 0.0
        %663 = vmatpush.xpose.msra.mxu0 %v646
        %664 = vmatmul.f32.gmra.mxu0 %v643
        %v665 = vpop.f32.mrf.mxu0
        %v666 = vadd.f32 0.0, %v665
        %667 = vdwg.mxu0
        %v668 = vmul.f32 %v666, %v563
        %v669 = vsel %vm562, -10000000.0, %v668
        %v670 = vand.u32 2147483647, %v669
        %v671 = vsel %vm564, %v670, -inf
        %672 = vmax.xlane.f32.xlu0 %v671
        %v673 = vpop.xlane.xlu0 %672
        %v674 = vsub.f32 %v670, %v673
        %v675 = vmul.f32 %v674, 1.442695
        %v676 = vpow.pop %v675
        %v677 = vsel %vm564, %v676, 0.0
        %678 = vadd.xlane.f32.xlu0 %v677
        %v679 = vpop.xlane.xlu0 %678
        %v680 = vrcp.pop %v679
        %v681 = vmul.f32 %v679, %v680
        %v682 = vsub.f32 1.0, %v681
        %v683 = vmul.f32 %v680, %v682
        %v684 = vadd.f32 %v680, %v683
        %vm685 = vweird.f32 %v679
        %vm686 = vweird.f32 %v680
        %vm687 = vmor %vm685, %vm686
        %v688 = vsel %vm687, %v680, %v684
        %v689 = vand.u32 2147483647, %v679
        %vm690 = vcmp.eq.f32.partialorder %v689, 8.507059e+37
        %v691 = vand.u32 %v679, 2147483648
        %v692 = vor.u32 1.1754944e-38, %v691
        %v693 = vsel %vm690, %v692, %v688
        %v694 = vmul.f32 %v676, %v693
        %v696 = vsel %vm564, %v694, 0
        %698 = vmatpush.msra.mxu0 0.0
        %699 = vmatpush.msra.mxu0 0.0
        %700 = vmatpush.msra.mxu0 0.0
        %701 = vmatpush.msra.mxu0 0.0
        %702 = vmatpush.msra.mxu0 0.0
        %703 = vmatpush.msra.mxu0 0.0
        %704 = vmatpush.msra.mxu0 0.0
        %705 = vmatpush.msra.mxu0 0.0
        %706 = vmatpush.msra.mxu0 0.0
        %707 = vmatpush.msra.mxu0 0.0
        %708 = vmatpush.msra.mxu0 0.0
        %709 = vmatpush.msra.mxu0 0.0
        %710 = vmatpush.msra.mxu0 0.0
        %711 = vmatpush.msra.mxu0 0.0
        %712 = vmatpush.msra.mxu0 0.0
        %713 = vmatpush.msra.mxu0 %v550
        %714 = vmatmul.f32.gmra.mxu0 %v696
        %v715 = vpop.f32.mrf.mxu0
        %v716 = vadd.f32 0.0, %v715
        %717 = vdwg.mxu0
        %719 = vrot.lane.b32.xlu0 %v716, 8
        %v720 = vpop.permute.xlu0 %719
        %vm722 = vcmask 130112
        %723 = vst.msk [vmem:[#allocation2] sm:$0xff] %vm722, %v720
        %v725 = vsel %vm564, %v405, 0
        %v728 = vsel %vm564, %v479, 0
        %730 = vmatpush.xpose.msra.mxu0 0.0
        %731 = vmatpush.xpose.msra.mxu0 0.0
        %732 = vmatpush.xpose.msra.mxu0 0.0
        %733 = vmatpush.xpose.msra.mxu0 0.0
        %734 = vmatpush.xpose.msra.mxu0 0.0
        %735 = vmatpush.xpose.msra.mxu0 0.0
        %736 = vmatpush.xpose.msra.mxu0 0.0
        %737 = vmatpush.xpose.msra.mxu0 0.0
        %738 = vmatpush.xpose.msra.mxu0 0.0
        %739 = vmatpush.xpose.msra.mxu0 0.0
        %740 = vmatpush.xpose.msra.mxu0 0.0
        %741 = vmatpush.xpose.msra.mxu0 0.0
        %742 = vmatpush.xpose.msra.mxu0 0.0
        %743 = vmatpush.xpose.msra.mxu0 0.0
        %744 = vmatpush.xpose.msra.mxu0 0.0
        %745 = vmatpush.xpose.msra.mxu0 %v728
        %746 = vmatmul.f32.gmra.mxu0 %v725
        %v747 = vpop.f32.mrf.mxu0
        %v748 = vadd.f32 0.0, %v747
        %749 = vdwg.mxu0
        %v750 = vmul.f32 %v748, %v563
        %v751 = vsel %vm562, -10000000.0, %v750
        %v752 = vand.u32 2147483647, %v751
        %v753 = vsel %vm564, %v752, -inf
        %754 = vmax.xlane.f32.xlu0 %v753
        %v755 = vpop.xlane.xlu0 %754
        %v756 = vsub.f32 %v752, %v755
        %v757 = vmul.f32 %v756, 1.442695
        %v758 = vpow.pop %v757
        %v759 = vsel %vm564, %v758, 0.0
        %760 = vadd.xlane.f32.xlu0 %v759
        %v761 = vpop.xlane.xlu0 %760
        %v762 = vrcp.pop %v761
        %v763 = vmul.f32 %v761, %v762
        %v764 = vsub.f32 1.0, %v763
        %v765 = vmul.f32 %v762, %v764
        %v766 = vadd.f32 %v762, %v765
        %vm767 = vweird.f32 %v761
        %vm768 = vweird.f32 %v762
        %vm769 = vmor %vm767, %vm768
        %v770 = vsel %vm769, %v762, %v766
        %v771 = vand.u32 2147483647, %v761
        %vm772 = vcmp.eq.f32.partialorder %v771, 8.507059e+37
        %v773 = vand.u32 %v761, 2147483648
        %v774 = vor.u32 1.1754944e-38, %v773
        %v775 = vsel %vm772, %v774, %v770
        %v776 = vmul.f32 %v758, %v775
        %v778 = vsel %vm564, %v776, 0
        %780 = vmatpush.msra.mxu0 0.0
        %781 = vmatpush.msra.mxu0 0.0
        %782 = vmatpush.msra.mxu0 0.0
        %783 = vmatpush.msra.mxu0 0.0
        %784 = vmatpush.msra.mxu0 0.0
        %785 = vmatpush.msra.mxu0 0.0
        %786 = vmatpush.msra.mxu0 0.0
        %787 = vmatpush.msra.mxu0 0.0
        %788 = vmatpush.msra.mxu0 0.0
        %789 = vmatpush.msra.mxu0 0.0
        %790 = vmatpush.msra.mxu0 0.0
        %791 = vmatpush.msra.mxu0 0.0
        %792 = vmatpush.msra.mxu0 0.0
        %793 = vmatpush.msra.mxu0 0.0
        %794 = vmatpush.msra.mxu0 0.0
        %795 = vmatpush.msra.mxu0 %v553
        %796 = vmatmul.f32.gmra.mxu0 %v778
        %v797 = vpop.f32.mrf.mxu0
        %v798 = vadd.f32 0.0, %v797
        %799 = vdwg.mxu0
        %801 = vrot.lane.b32.xlu0 %v798, 16
        %v802 = vpop.permute.xlu0 %801
        %vm804 = vcmask 195712
        %805 = vst.msk [vmem:[#allocation2] sm:$0xff] %vm804, %v802
        %v807 = vsel %vm564, %v408, 0
        %v810 = vsel %vm564, %v482, 0
        %812 = vmatpush.xpose.msra.mxu0 0.0
        %813 = vmatpush.xpose.msra.mxu0 0.0
        %814 = vmatpush.xpose.msra.mxu0 0.0
        %815 = vmatpush.xpose.msra.mxu0 0.0
        %816 = vmatpush.xpose.msra.mxu0 0.0
        %817 = vmatpush.xpose.msra.mxu0 0.0
        %818 = vmatpush.xpose.msra.mxu0 0.0
        %819 = vmatpush.xpose.msra.mxu0 0.0
        %820 = vmatpush.xpose.msra.mxu0 0.0
        %821 = vmatpush.xpose.msra.mxu0 0.0
        %822 = vmatpush.xpose.msra.mxu0 0.0
        %823 = vmatpush.xpose.msra.mxu0 0.0
        %824 = vmatpush.xpose.msra.mxu0 0.0
        %825 = vmatpush.xpose.msra.mxu0 0.0
        %826 = vmatpush.xpose.msra.mxu0 0.0
        %827 = vmatpush.xpose.msra.mxu0 %v810
        %828 = vmatmul.f32.gmra.mxu0 %v807
        %v829 = vpop.f32.mrf.mxu0
        %v830 = vadd.f32 0.0, %v829
        %831 = vdwg.mxu0
        %v832 = vmul.f32 %v830, %v563
        %v833 = vsel %vm562, -10000000.0, %v832
        %v834 = vand.u32 2147483647, %v833
        %v835 = vsel %vm564, %v834, -inf
        %836 = vmax.xlane.f32.xlu0 %v835
        %v837 = vpop.xlane.xlu0 %836
        %v838 = vsub.f32 %v834, %v837
        %v839 = vmul.f32 %v838, 1.442695
        %v840 = vpow.pop %v839
        %v841 = vsel %vm564, %v840, 0.0
        %842 = vadd.xlane.f32.xlu0 %v841
        %v843 = vpop.xlane.xlu0 %842
        %v844 = vrcp.pop %v843
        %v845 = vmul.f32 %v843, %v844
        %v846 = vsub.f32 1.0, %v845
        %v847 = vmul.f32 %v844, %v846
        %v848 = vadd.f32 %v844, %v847
        %vm849 = vweird.f32 %v843
        %vm850 = vweird.f32 %v844
        %vm851 = vmor %vm849, %vm850
        %v852 = vsel %vm851, %v844, %v848
        %v853 = vand.u32 2147483647, %v843
        %vm854 = vcmp.eq.f32.partialorder %v853, 8.507059e+37
        %v855 = vand.u32 %v843, 2147483648
        %v856 = vor.u32 1.1754944e-38, %v855
        %v857 = vsel %vm854, %v856, %v852
        %v858 = vmul.f32 %v840, %v857
        %v860 = vsel %vm564, %v858, 0
        %862 = vmatpush.msra.mxu0 0.0
        %863 = vmatpush.msra.mxu0 0.0
        %864 = vmatpush.msra.mxu0 0.0
        %865 = vmatpush.msra.mxu0 0.0
        %866 = vmatpush.msra.mxu0 0.0
        %867 = vmatpush.msra.mxu0 0.0
        %868 = vmatpush.msra.mxu0 0.0
        %869 = vmatpush.msra.mxu0 0.0
        %870 = vmatpush.msra.mxu0 0.0
        %871 = vmatpush.msra.mxu0 0.0
        %872 = vmatpush.msra.mxu0 0.0
        %873 = vmatpush.msra.mxu0 0.0
        %874 = vmatpush.msra.mxu0 0.0
        %875 = vmatpush.msra.mxu0 0.0
        %876 = vmatpush.msra.mxu0 0.0
        %877 = vmatpush.msra.mxu0 %v556
        %878 = vmatmul.f32.gmra.mxu0 %v860
        %v879 = vpop.f32.mrf.mxu0
        %v880 = vadd.f32 0.0, %v879
        %881 = vdwg.mxu0
        %883 = vrot.lane.b32.xlu0 %v880, 24
        %v884 = vpop.permute.xlu0 %883
        %vm886 = vcmask 261312
        %887 = vst.msk [vmem:[#allocation2] sm:$0xff] %vm886, %v884
        %v888 = vld [vmem:[#allocation2] sm:$0xff]
        %s889 = scalar_lea.vmem [#allocation5], 96
        %v890 = vld [vmem:[%s889] sm:$0xff]
        %v891 = vld [vmem:[%s889 + $0x8] sm:$0xff]
        %v892 = vld [vmem:[%s889 + $0x10] sm:$0xff]
        %v893 = vld [vmem:[%s889 + $0x18] sm:$0xff]
        %v894 = vld [vmem:[%s6] sm:$0x1]
        %v896 = vperm.slane %v894, 0
        %v899 = vsel %vm365, %v888, 0
        %v902 = vsel %vm365, %v890, 0
        %v905 = vsel %vm365, %v891, 0
        %v908 = vsel %vm365, %v892, 0
        %v911 = vsel %vm365, %v893, 0
        %913 = vmatpush.xpose.msra.mxu0 0.0
        %914 = vmatpush.xpose.msra.mxu0 0.0
        %915 = vmatpush.xpose.msra.mxu0 0.0
        %916 = vmatpush.xpose.msra.mxu0 0.0
        %917 = vmatpush.xpose.msra.mxu0 0.0
        %918 = vmatpush.xpose.msra.mxu0 0.0
        %919 = vmatpush.xpose.msra.mxu0 0.0
        %920 = vmatpush.xpose.msra.mxu0 0.0
        %921 = vmatpush.xpose.msra.mxu0 0.0
        %922 = vmatpush.xpose.msra.mxu0 0.0
        %923 = vmatpush.xpose.msra.mxu0 0.0
        %924 = vmatpush.xpose.msra.mxu0 0.0
        %925 = vmatpush.xpose.msra.mxu0 %v911
        %926 = vmatpush.xpose.msra.mxu0 %v908
        %927 = vmatpush.xpose.msra.mxu0 %v905
        %928 = vmatpush.xpose.msra.mxu0 %v902
        %929 = vmatmul.f32.gmra.mxu0 %v899
        %v930 = vpop.f32.mrf.mxu0
        %v931 = vadd.f32 %v896, %v930
        %932 = vdwg.mxu0
        %v933 = vadd.f32 %v931, %v334
        %934 = vst.msk [vmem:[%s321] sm:$0xff] %vm365, %v933
        %s935 = sand.u32 %s201, 1
        %s936 = scalar_lea.sflag [#allocation7], %s935
        %s937 = sand.u32 %s201, 1
        %s938 = smul.addr %s937, 8
        %s939 = scalar_lea.vmem [#allocation8], %s938
        // Predicated region
        $region53: #{tpu_custom_call.1} parent=47 // pred_check
          %p940 = pneg %p211
        $region54: #{tpu_custom_call.1} parent=47 // pred_check_branch
          %942 = sbr.rel (%p940) target = $region56
        $region55: #{tpu_custom_call.1} parent=47 // pred_region
          %944 = vsyncadd %s936, 0
          %s945 = smul.addr %s31, 8
          %s946 = scalar_lea.hbm %s8, %s945
          %s948 = sshll.u32 %s939, 4
          %s949 = int_to_ptr.vmem [resolvable:$true] %s948
          %s950 = sshll.u32 %s946, 4
          %s951 = int_to_ptr.hbm [resolvable:$true] %s950
          %953 = dma.vmem_to_hbm [thread:$0]  %s949, 128, %s951, %s936
        $region56: #{tpu_custom_call.1} parent=47 // pred_fallthru
          _
      $region48: #{tpu_custom_call.1} parent=5 // pred_fallthru
        _
      %p954 = scmp.le.s32.totalorder 2, %s26
      // Predicated region
      $region57: #{tpu_custom_call.1} parent=5 // pred_check
        %p955 = pneg %p954
      $region58: #{tpu_custom_call.1} parent=5 // pred_check_branch
        %957 = sbr.rel (%p955) target = $region60
      $region59: #{tpu_custom_call.1} parent=5 // pred_region
        %s958 = ssub.s32 %s26, 2
        // Predicated region
        $region61: #{tpu_custom_call.1} parent=59 // pred_check
          %p959 = pneg %p217
        $region62: #{tpu_custom_call.1} parent=59 // pred_check_branch
          %961 = sbr.rel (%p959) target = $region64
        $region63: #{tpu_custom_call.1} parent=59 // pred_region
          %s962 = sand.u32 %s202, 1
          %s963 = scalar_lea.sflag [#allocation7], %s962
          %s964 = sand.u32 %s202, 1
          %s965 = smul.addr %s964, 8
          %s966 = scalar_lea.vmem [#allocation8], %s965
          %968 = dma.done %s963, 128
        $region64: #{tpu_custom_call.1} parent=59 // pred_fallthru
          _
      $region60: #{tpu_custom_call.1} parent=5 // pred_fallthru
        _
    $region6: #{tpu_custom_call.1} parent=1 // loop_footer
      %s30 = sadd.s32 1, %s26
    $region7: #{tpu_custom_call.1} parent=1 // loop_footer_branch
      %25 = sbr.rel target = $region3
    $region8: #{tpu_custom_call.1} parent=1 // loop_exit
      _
    %969 = vsyncpa [#allocation6], 1
    %s970 = scalar_lea.sflag [#allocation6], 1
    %971 = vsyncpa %s970, 1
    %972 = vsyncpa [#allocation7], 1
    %s973 = scalar_lea.sflag [#allocation7], 1
    %974 = vsyncpa %s973, 1

</llo_original>
